<compile_context>
chip_gen: v5e
topology: v5e:2x2
jax: 0.10.0
libtpu: 0.0.40
codegen_flags: <defaults>
</compile_context>

<pallas_src>
import functools

import jax
import jax.numpy as jnp
from jax.experimental import pallas as pl
from jax.experimental.pallas import tpu as pltpu


def decoder_kernel(inp_ref, enc_ref, h_ref,
                   w_att_ref, b_att_ref,
                   w_gate_ref, b_gate_ref,
                   w_out_ref, b_out_ref,
                   out_ref, h_new_ref,
                   att_in_ref, gate_in_ref, out_in_ref,
                   *, E: int, A: int, H: int):
    h0 = h_ref[...]                                        # [B, H] f32

    # --- attention Linear + tanh -------------------------------------------
    # x = [inputs | encoder_outputs] built in a bf16 VMEM scratch so the
    # projection is a single MXU matmul.
    att_in_ref[:, :E] = inp_ref[...].astype(jnp.bfloat16)
    att_in_ref[:, E:] = enc_ref[...].astype(jnp.bfloat16)
    a = jnp.tanh(
        jnp.dot(att_in_ref[...], w_att_ref[...],
                preferred_element_type=jnp.float32)
        + b_att_ref[...]
    )                                                      # [B, A] f32

    # --- fused GRU gate matmul ----------------------------------------------
    # g = [a | h0] @ W_packed + b_packed
    #   columns: [ gi_rz + gh_rz (2H) | gi_n (H) | gh_n (H) ]
    gate_in_ref[:, :A] = a.astype(jnp.bfloat16)
    gate_in_ref[:, A:] = h0.astype(jnp.bfloat16)
    g = (jnp.dot(gate_in_ref[...], w_gate_ref[...],
                 preferred_element_type=jnp.float32)
         + b_gate_ref[...])                                # [B, 4H] f32

    r = jax.nn.sigmoid(g[:, 0:H])
    z = jax.nn.sigmoid(g[:, H:2 * H])
    n = jnp.tanh(g[:, 2 * H:3 * H] + r * g[:, 3 * H:4 * H])
    h_new = (1.0 - z) * n + z * h0                         # [B, H] f32

    # --- fused output matmul --------------------------------------------------
    # out = relu([h_new | a]) @ [W_out_h ; W_out_a] + b_out
    out_in_ref[:, :H] = jax.nn.relu(h_new).astype(jnp.bfloat16)
    out_in_ref[:, H:] = jax.nn.relu(a).astype(jnp.bfloat16)
    out_ref[...] = (
        jnp.dot(out_in_ref[...], w_out_ref[...],
                preferred_element_type=jnp.float32)
        + b_out_ref[...]
    )                                                      # [B, Vp] f32 (lane-dense)
    h_new_ref[...] = h_new


def _round_up(n: int, m: int) -> int:
    return ((n + m - 1) // m) * m


def pack_params(params):
    """One-time packing: fuse GRU gate weights, stack/pad output weights, cast to bf16."""
    A = params["w_ih"].shape[0]
    H = params["w_hh"].shape[0]
    V = params["b_out"].shape[-1]
    Vp = _round_up(V, 128)

    w_ih, w_hh = params["w_ih"], params["w_hh"]               # [A,3H], [H,3H]

    # fused gate weight [A+H, 4H]: cols = [rz (both paths) | gi_n | gh_n]
    w_gate = jnp.zeros((A + H, 4 * H), jnp.float32)
    w_gate = w_gate.at[:A, :2 * H].set(w_ih[:, :2 * H])
    w_gate = w_gate.at[A:, :2 * H].set(w_hh[:, :2 * H])
    w_gate = w_gate.at[:A, 2 * H:3 * H].set(w_ih[:, 2 * H:])
    w_gate = w_gate.at[A:, 3 * H:].set(w_hh[:, 2 * H:])
    b_gate = jnp.concatenate(
        [params["b_ih"][:, :2 * H] + params["b_hh"][:, :2 * H],
         params["b_ih"][:, 2 * H:],
         params["b_hh"][:, 2 * H:]], axis=-1)                 # [1, 4H]

    # fused + lane-padded output weight [H+A, Vp]
    w_out = jnp.concatenate([params["w_out_h"], params["w_out_a"]], axis=0)
    w_out = jnp.zeros((H + A, Vp), jnp.float32).at[:, :V].set(w_out)
    b_out = jnp.zeros((1, Vp), jnp.float32).at[:, :V].set(params["b_out"])

    return dict(
        w_att=params["w_att"].astype(jnp.bfloat16),
        b_att=params["b_att"],
        w_gate=w_gate.astype(jnp.bfloat16),
        b_gate=b_gate,
        w_out=w_out.astype(jnp.bfloat16),
        b_out=b_out,
    )


@functools.partial(jax.jit, static_argnames=("vocab_size",))
def decoder_forward(inputs, hidden, encoder_outputs, packed, *, vocab_size):
    """inputs: [B,1,E], hidden: [1,B,H], encoder_outputs: [B,C] (PyTorch layout).
    Returns (out [1,B,V], hidden [1,B,H])."""
    B, _, E = inputs.shape
    C = encoder_outputs.shape[-1]
    H = hidden.shape[-1]
    A = packed["w_gate"].shape[0] - H
    Vp = packed["w_out"].shape[1]

    inp2d = inputs.reshape(B, E)                              # seq dim is 1 by construction
    h0 = hidden[0]                                            # [B, H] f32

    vmem = pl.BlockSpec(memory_space=pltpu.MemorySpace.VMEM)
    out_pad, h_new = pl.pallas_call(
        functools.partial(decoder_kernel, E=E, A=A, H=H),
        out_shape=(
            jax.ShapeDtypeStruct((B, Vp), jnp.float32),
            jax.ShapeDtypeStruct((B, H), jnp.float32),
        ),
        in_specs=[vmem] * 9,
        out_specs=(vmem, vmem),
        scratch_shapes=[
            pltpu.VMEM((B, E + C), jnp.bfloat16),  # [inputs | enc]    att-matmul input
            pltpu.VMEM((B, A + H), jnp.bfloat16),  # [a | h0]          gate-matmul input
            pltpu.VMEM((B, H + A), jnp.bfloat16),  # [relu(h)|relu(a)] out-matmul input
        ],
        input_output_aliases={2: 1},               # h0 buffer reused for h_new
    )(
        inp2d, encoder_outputs, h0,
        packed["w_att"], packed["b_att"],
        packed["w_gate"], packed["b_gate"],
        packed["w_out"], packed["b_out"],
    )

    out = out_pad[:, :vocab_size]
    # PyTorch returns seq-first tensors: out (1, B, V), hidden (1, B, H)
    return out[None, :, :], h_new[None, :, :]


def decoder_reference(inputs, hidden, encoder_outputs, params):
    """Pure-JAX f32 reference with identical math (for verification)."""
    H = params["w_hh"].shape[0]
    x_cat = jnp.concatenate([inputs[:, 0, :], encoder_outputs], axis=-1)
    h0 = hidden[0]
    a = jnp.tanh(x_cat @ params["w_att"] + params["b_att"])
    gi = a @ params["w_ih"] + params["b_ih"]
    gh = h0 @ params["w_hh"] + params["b_hh"]
    r = jax.nn.sigmoid(gi[:, :H] + gh[:, :H])
    z = jax.nn.sigmoid(gi[:, H:2 * H] + gh[:, H:2 * H])
    n = jnp.tanh(gi[:, 2 * H:] + r * gh[:, 2 * H:])
    h_new = (1.0 - z) * n + z * h0
    cat = jax.nn.relu(jnp.concatenate([h_new, a], axis=-1))
    w_out = jnp.concatenate([params["w_out_h"], params["w_out_a"]], axis=0)
    out = cat @ w_out + params["b_out"]
    return out[None], h_new[None]


if __name__ == "__main__":
    # Small, forward-consistent shapes:
    #   batch B=8, embedding_dim E=16, encoder_dim C=16,
    #   attention_dim A=32, hidden_size H=32, vocab_size V=64
    B, E, C, A, H, V = 8, 16, 16, 32, 32, 64

    key = jax.random.PRNGKey(0)
    ks = jax.random.split(key, 12)
    s = 0.1
    # w_* hold the transposed (x @ W) layout of the corresponding PyTorch weights.
    params = dict(
        w_att=s * jax.random.normal(ks[0], (E + C, A), jnp.float32),
        b_att=s * jax.random.normal(ks[1], (1, A), jnp.float32),
        w_ih=s * jax.random.normal(ks[2], (A, 3 * H), jnp.float32),
        b_ih=s * jax.random.normal(ks[3], (1, 3 * H), jnp.float32),
        w_hh=s * jax.random.normal(ks[4], (H, 3 * H), jnp.float32),
        b_hh=s * jax.random.normal(ks[5], (1, 3 * H), jnp.float32),
        w_out_h=s * jax.random.normal(ks[6], (H, V), jnp.float32),
        w_out_a=s * jax.random.normal(ks[7], (A, V), jnp.float32),
        b_out=s * jax.random.normal(ks[8], (1, V), jnp.float32),
    )

    inputs = jax.random.normal(ks[9], (B, 1, E), jnp.float32)          # (B, 1, embedding_dim)
    encoder_outputs = jax.random.normal(ks[10], (B, C), jnp.float32)   # (B, encoder_dim)
    hidden = jnp.zeros((1, B, H), jnp.float32)                         # initHidden(B)

    packed = pack_params(params)     # one-time weight fuse / pad / bf16 cast
    out, h_new = decoder_forward(inputs, hidden, encoder_outputs, packed, vocab_size=V)
    jax.block_until_ready((out, h_new))

    ref_out, ref_h = decoder_reference(inputs, hidden, encoder_outputs, params)
    assert out.shape == (1, B, V) and h_new.shape == (1, B, H)
    # bf16 MXU operands -> looser tolerance vs. the f32 reference
    assert jnp.allclose(out, ref_out, atol=2e-2, rtol=2e-2), \
        float(jnp.max(jnp.abs(out - ref_out)))
    assert jnp.allclose(h_new, ref_h, atol=2e-2, rtol=2e-2), \
        float(jnp.max(jnp.abs(h_new - ref_h)))

    print("KERNEL_OK")
</pallas_src>

<mosaic_0001>
module attributes {stable_mosaic.version = 11 : i64} {
  func.func @decoder_kernel(%arg0: memref<8x16xf32, #tpu.memory_space<vmem>>, %arg1: memref<8x16xf32, #tpu.memory_space<vmem>>, %arg2: memref<8x32xf32, #tpu.memory_space<vmem>>, %arg3: memref<32x32xbf16, #tpu.memory_space<vmem>>, %arg4: memref<1x32xf32, #tpu.memory_space<vmem>>, %arg5: memref<64x128xbf16, #tpu.memory_space<vmem>>, %arg6: memref<1x128xf32, #tpu.memory_space<vmem>>, %arg7: memref<64x128xbf16, #tpu.memory_space<vmem>>, %arg8: memref<1x128xf32, #tpu.memory_space<vmem>>, %arg9: memref<8x128xf32, #tpu.memory_space<vmem>>, %arg10: memref<8x32xf32, #tpu.memory_space<vmem>>, %arg11: memref<8x32xbf16, #tpu.memory_space<vmem>>, %arg12: memref<8x64xbf16, #tpu.memory_space<vmem>>, %arg13: memref<8x64xbf16, #tpu.memory_space<vmem>>) attributes {dimension_semantics = [], scalar_prefetch = 0 : i64, scratch_operands = 3 : i64, tpu.core_type = #tpu.core_type<tc>} {
    %c0 = arith.constant 0 : index
    %c0_0 = arith.constant 0 : index
    %0 = vector.load %arg2[%c0, %c0_0] : memref<8x32xf32, #tpu.memory_space<vmem>>, vector<8x32xf32>
    %c0_1 = arith.constant 0 : index
    %c0_2 = arith.constant 0 : index
    %1 = vector.load %arg0[%c0_1, %c0_2] : memref<8x16xf32, #tpu.memory_space<vmem>>, vector<8x16xf32>
    %2 = arith.truncf %1 : vector<8x16xf32> to vector<8x16xbf16>
    %c0_3 = arith.constant 0 : index
    %c0_4 = arith.constant 0 : index
    %3 = vector.load %arg11[%c0_3, %c0_4] : memref<8x32xbf16, #tpu.memory_space<vmem>>, vector<8x16xbf16>
    tpu.vector_store %arg11[%c0_3, %c0_4], %2 {strides = array<i32>} : memref<8x32xbf16, #tpu.memory_space<vmem>>, vector<8x16xbf16>,
    %c0_5 = arith.constant 0 : index
    %c0_6 = arith.constant 0 : index
    %4 = vector.load %arg1[%c0_5, %c0_6] : memref<8x16xf32, #tpu.memory_space<vmem>>, vector<8x16xf32>
    %5 = arith.truncf %4 : vector<8x16xf32> to vector<8x16xbf16>
    %c0_7 = arith.constant 0 : index
    %c16 = arith.constant 16 : index
    %6 = vector.load %arg11[%c0_7, %c16] : memref<8x32xbf16, #tpu.memory_space<vmem>>, vector<8x16xbf16>
    tpu.vector_store %arg11[%c0_7, %c16], %5 {strides = array<i32>} : memref<8x32xbf16, #tpu.memory_space<vmem>>, vector<8x16xbf16>,
    %c0_8 = arith.constant 0 : index
    %c0_9 = arith.constant 0 : index
    %7 = vector.load %arg11[%c0_8, %c0_9] : memref<8x32xbf16, #tpu.memory_space<vmem>>, vector<8x32xbf16>
    %c0_10 = arith.constant 0 : index
    %c0_11 = arith.constant 0 : index
    %8 = vector.load %arg3[%c0_10, %c0_11] : memref<32x32xbf16, #tpu.memory_space<vmem>>, vector<32x32xbf16>
    %cst = arith.constant dense<0.000000e+00> : vector<8x32xf32>
    %9 = tpu.matmul %7, %8, %cst {dimension_numbers = #tpu.dot_dimension_numbers<[1], [0], [0], [1], [0, 0, 1, 1], [], []>} : vector<8x32xbf16>, vector<32x32xbf16>, vector<8x32xf32> -> vector<8x32xf32>
    %c0_12 = arith.constant 0 : index
    %c0_13 = arith.constant 0 : index
    %10 = vector.load %arg4[%c0_12, %c0_13] : memref<1x32xf32, #tpu.memory_space<vmem>>, vector<1x32xf32>
    %11 = vector.broadcast %10 : vector<1x32xf32> to vector<8x32xf32>
    %12 = arith.addf %9, %11 : vector<8x32xf32>
    %13 = math.tanh %12 : vector<8x32xf32>
    %14 = arith.truncf %13 : vector<8x32xf32> to vector<8x32xbf16>
    %c0_14 = arith.constant 0 : index
    %c0_15 = arith.constant 0 : index
    %15 = vector.load %arg12[%c0_14, %c0_15] : memref<8x64xbf16, #tpu.memory_space<vmem>>, vector<8x32xbf16>
    tpu.vector_store %arg12[%c0_14, %c0_15], %14 {strides = array<i32>} : memref<8x64xbf16, #tpu.memory_space<vmem>>, vector<8x32xbf16>,
    %16 = arith.truncf %0 : vector<8x32xf32> to vector<8x32xbf16>
    %c0_16 = arith.constant 0 : index
    %c32 = arith.constant 32 : index
    %17 = vector.load %arg12[%c0_16, %c32] : memref<8x64xbf16, #tpu.memory_space<vmem>>, vector<8x32xbf16>
    tpu.vector_store %arg12[%c0_16, %c32], %16 {strides = array<i32>} : memref<8x64xbf16, #tpu.memory_space<vmem>>, vector<8x32xbf16>,
    %c0_17 = arith.constant 0 : index
    %c0_18 = arith.constant 0 : index
    %18 = vector.load %arg12[%c0_17, %c0_18] : memref<8x64xbf16, #tpu.memory_space<vmem>>, vector<8x64xbf16>
    %c0_19 = arith.constant 0 : index
    %c0_20 = arith.constant 0 : index
    %19 = vector.load %arg5[%c0_19, %c0_20] : memref<64x128xbf16, #tpu.memory_space<vmem>>, vector<64x128xbf16>
    %cst_21 = arith.constant dense<0.000000e+00> : vector<8x128xf32>
    %20 = tpu.matmul %18, %19, %cst_21 {dimension_numbers = #tpu.dot_dimension_numbers<[1], [0], [0], [1], [0, 0, 1, 1], [], []>} : vector<8x64xbf16>, vector<64x128xbf16>, vector<8x128xf32> -> vector<8x128xf32>
    %c0_22 = arith.constant 0 : index
    %c0_23 = arith.constant 0 : index
    %21 = vector.load %arg6[%c0_22, %c0_23] : memref<1x128xf32, #tpu.memory_space<vmem>>, vector<1x128xf32>
    %22 = vector.broadcast %21 : vector<1x128xf32> to vector<8x128xf32>
    %23 = arith.addf %20, %22 : vector<8x128xf32>
    %24 = vector.extract_strided_slice %23 {offsets = [0, 0], sizes = [8, 32], strides = [1, 1]} : vector<8x128xf32> to vector<8x32xf32>
    %25 = arith.negf %24 : vector<8x32xf32>
    %26 = math.exp %25 : vector<8x32xf32>
    %cst_24 = arith.constant 1.000000e+00 : f32
    %27 = vector.broadcast %cst_24 : f32 to vector<8x32xf32>
    %28 = arith.addf %27, %26 : vector<8x32xf32>
    %29 = arith.divf %27, %28 : vector<8x32xf32>
    %30 = vector.extract_strided_slice %23 {offsets = [0, 32], sizes = [8, 32], strides = [1, 1]} : vector<8x128xf32> to vector<8x32xf32>
    %31 = arith.negf %30 : vector<8x32xf32>
    %32 = math.exp %31 : vector<8x32xf32>
    %cst_25 = arith.constant 1.000000e+00 : f32
    %33 = vector.broadcast %cst_25 : f32 to vector<8x32xf32>
    %34 = arith.addf %33, %32 : vector<8x32xf32>
    %35 = arith.divf %33, %34 : vector<8x32xf32>
    %36 = vector.extract_strided_slice %23 {offsets = [0, 64], sizes = [8, 32], strides = [1, 1]} : vector<8x128xf32> to vector<8x32xf32>
    %37 = vector.extract_strided_slice %23 {offsets = [0, 96], sizes = [8, 32], strides = [1, 1]} : vector<8x128xf32> to vector<8x32xf32>
    %38 = arith.mulf %29, %37 : vector<8x32xf32>
    %39 = arith.addf %36, %38 : vector<8x32xf32>
    %40 = math.tanh %39 : vector<8x32xf32>
    %cst_26 = arith.constant 1.000000e+00 : f32
    %41 = vector.broadcast %cst_26 : f32 to vector<8x32xf32>
    %42 = arith.subf %41, %35 : vector<8x32xf32>
    %43 = arith.mulf %42, %40 : vector<8x32xf32>
    %44 = arith.mulf %35, %0 : vector<8x32xf32>
    %45 = arith.addf %43, %44 : vector<8x32xf32>
    %cst_27 = arith.constant 0.000000e+00 : f32
    %46 = vector.broadcast %cst_27 : f32 to vector<8x32xf32>
    %47 = arith.maximumf %45, %46 : vector<8x32xf32>
    %48 = arith.truncf %47 : vector<8x32xf32> to vector<8x32xbf16>
    %c0_28 = arith.constant 0 : index
    %c0_29 = arith.constant 0 : index
    %49 = vector.load %arg13[%c0_28, %c0_29] : memref<8x64xbf16, #tpu.memory_space<vmem>>, vector<8x32xbf16>
    tpu.vector_store %arg13[%c0_28, %c0_29], %48 {strides = array<i32>} : memref<8x64xbf16, #tpu.memory_space<vmem>>, vector<8x32xbf16>,
    %cst_30 = arith.constant 0.000000e+00 : f32
    %50 = vector.broadcast %cst_30 : f32 to vector<8x32xf32>
    %51 = arith.maximumf %13, %50 : vector<8x32xf32>
    %52 = arith.truncf %51 : vector<8x32xf32> to vector<8x32xbf16>
    %c0_31 = arith.constant 0 : index
    %c32_32 = arith.constant 32 : index
    %53 = vector.load %arg13[%c0_31, %c32_32] : memref<8x64xbf16, #tpu.memory_space<vmem>>, vector<8x32xbf16>
    tpu.vector_store %arg13[%c0_31, %c32_32], %52 {strides = array<i32>} : memref<8x64xbf16, #tpu.memory_space<vmem>>, vector<8x32xbf16>,
    %c0_33 = arith.constant 0 : index
    %c0_34 = arith.constant 0 : index
    %54 = vector.load %arg13[%c0_33, %c0_34] : memref<8x64xbf16, #tpu.memory_space<vmem>>, vector<8x64xbf16>
    %c0_35 = arith.constant 0 : index
    %c0_36 = arith.constant 0 : index
    %55 = vector.load %arg7[%c0_35, %c0_36] : memref<64x128xbf16, #tpu.memory_space<vmem>>, vector<64x128xbf16>
    %cst_37 = arith.constant dense<0.000000e+00> : vector<8x128xf32>
    %56 = tpu.matmul %54, %55, %cst_37 {dimension_numbers = #tpu.dot_dimension_numbers<[1], [0], [0], [1], [0, 0, 1, 1], [], []>} : vector<8x64xbf16>, vector<64x128xbf16>, vector<8x128xf32> -> vector<8x128xf32>
    %c0_38 = arith.constant 0 : index
    %c0_39 = arith.constant 0 : index
    %57 = vector.load %arg8[%c0_38, %c0_39] : memref<1x128xf32, #tpu.memory_space<vmem>>, vector<1x128xf32>
    %58 = vector.broadcast %57 : vector<1x128xf32> to vector<8x128xf32>
    %59 = arith.addf %56, %58 : vector<8x128xf32>
    %c0_40 = arith.constant 0 : index
    %c0_41 = arith.constant 0 : index
    %60 = vector.load %arg9[%c0_40, %c0_41] : memref<8x128xf32, #tpu.memory_space<vmem>>, vector<8x128xf32>
    tpu.vector_store %arg9[%c0_40, %c0_41], %59 {strides = array<i32>} : memref<8x128xf32, #tpu.memory_space<vmem>>, vector<8x128xf32>,
    %c0_42 = arith.constant 0 : index
    %c0_43 = arith.constant 0 : index
    %61 = vector.load %arg10[%c0_42, %c0_43] : memref<8x32xf32, #tpu.memory_space<vmem>>, vector<8x32xf32>
    tpu.vector_store %arg10[%c0_42, %c0_43], %45 {strides = array<i32>} : memref<8x32xf32, #tpu.memory_space<vmem>>, vector<8x32xf32>,
    return
  }
}

</mosaic_0001>

<llo_original>
// kernel: decoder_forward.1
$region0: #{decoder_forward.1}
  #allocation0 [shape = 'u32[]', space=smem, size = 0x4, offset = 0x4, fixed_abs, tag = 'smem constant byte address 0x4 - core index']
  #allocation1 [shape = 'u32[72,128]{1,0:T(1,128)}', space=vmem, size = 0x9000, scoped, tag = 'internal scratch']
  #allocation2 [shape = 'bf16[8,32]{1,0:T(8,128)(2,1)}', space=vmem, size = 0x800, scoped, tag = 'scratch operand']
  #allocation3 [shape = 'bf16[8,64]{1,0:T(8,128)(2,1)}', space=vmem, size = 0x800, scoped, tag = 'scratch operand']
  #allocation4 [shape = 'bf16[8,64]{1,0:T(8,128)(2,1)}', space=vmem, size = 0x800, scoped, tag = 'scratch operand']
  %s0 = inlined_call_operand.vmem [shape: f32[8,16], index: 0, kind: input, shape index: {}]
  %s1 = inlined_call_operand.hbm [shape: f32[8,16], index: 1, kind: input, shape index: {}]
  %s2 = inlined_call_operand.vmem [shape: f32[8,32], index: 2, kind: input, shape index: {}, may-alias: {2,10}]
  %s3 = inlined_call_operand.hbm [shape: bf16[32,32], index: 3, kind: input, shape index: {}]
  %s4 = inlined_call_operand.vmem [shape: f32[1,32], index: 4, kind: input, shape index: {}]
  %s5 = inlined_call_operand.hbm [shape: bf16[64,128], index: 5, kind: input, shape index: {}]
  %s6 = inlined_call_operand.vmem [shape: f32[1,128], index: 6, kind: input, shape index: {}]
  %s7 = inlined_call_operand.hbm [shape: bf16[64,128], index: 7, kind: input, shape index: {}]
  %s8 = inlined_call_operand.vmem [shape: f32[1,128], index: 8, kind: input, shape index: {}]
  %s9 = inlined_call_operand.vmem [shape: f32[8,128], index: 9, kind: output, shape index: {0}]
  %s10 = inlined_call_operand.vmem [shape: f32[8,32], index: 10, kind: output, shape index: {1}, may-alias: {2,10}]
  %11 = xla_tuple %s9, %s10
  %s12 = sld [smem:[#allocation0]]
  $region70: #{decoder_forward.1} parent=0
    _
  %s14 = ssub.s32 1, %s12
  %s15 = scalar_select 0, %s14, %s12
  $region1: #{decoder_forward.1} parent=0
    #allocation5 [shape = 'u8[4096]{0}', space=vmem, size = 0x1000, scoped, tag = 'input window, operand 1, single buffered']
    #allocation6 [shape = 's32[1]{0}', space=sflag, size = 0x4, scoped, tag = 'scoped memory for decoder_forward.1']
    #allocation7 [shape = 'u8[8192]{0}', space=vmem, size = 0x2000, scoped, tag = 'input window, operand 3, single buffered']
    #allocation8 [shape = 's32[1]{0}', space=sflag, size = 0x4, scoped, tag = 'scoped memory for decoder_forward.1']
    #allocation9 [shape = 'u8[16384]{0}', space=vmem, size = 0x4000, scoped, tag = 'input window, operand 5, single buffered']
    #allocation10 [shape = 'u8[16384]{0}', space=vmem, size = 0x4000, scoped, tag = 'input window, operand 7, single buffered']
    #allocation11 [shape = 's32[1]{0}', space=sflag, size = 0x4, scoped, tag = 'scoped memory for decoder_forward.1']
    %16 = vsyncpa [#allocation6], 0
    %17 = vsyncpa [#allocation8], 0
    %18 = vsyncpa [#allocation11], 0
    // Predicated region
    $region2: #{decoder_forward.1} parent=1 // pred_check
      _
    $region3: #{decoder_forward.1} parent=1 // pred_check_branch
      %20 = sbr.rel (0) target = $region5
    $region4: #{decoder_forward.1} parent=1 // pred_region
      _
    $region5: #{decoder_forward.1} parent=1 // pred_fallthru
      _
    // Predicated region
    $region6: #{decoder_forward.1} parent=1 // pred_check
      _
    $region7: #{decoder_forward.1} parent=1 // pred_check_branch
      %22 = sbr.rel (0) target = $region9
    $region8: #{decoder_forward.1} parent=1 // pred_region
      %24 = vsyncadd [#allocation6], 0
      %s26 = sshll.u32 %s1, 4
      %s27 = int_to_ptr.hbm [resolvable:$true] %s26
      %s28 = sshll.u32 [#allocation5], 4
      %s29 = int_to_ptr.vmem [resolvable:$true] %s28
      %31 = dma.hbm_to_vmem [thread:$0]  %s27, 128, %s29, [#allocation6]
    $region9: #{decoder_forward.1} parent=1 // pred_fallthru
      _
    // Predicated region
    $region10: #{decoder_forward.1} parent=1 // pred_check
      _
    $region11: #{decoder_forward.1} parent=1 // pred_check_branch
      %33 = sbr.rel (0) target = $region13
    $region12: #{decoder_forward.1} parent=1 // pred_region
      _
    $region13: #{decoder_forward.1} parent=1 // pred_fallthru
      _
    // Predicated region
    $region14: #{decoder_forward.1} parent=1 // pred_check
      _
    $region15: #{decoder_forward.1} parent=1 // pred_check_branch
      %35 = sbr.rel (0) target = $region17
    $region16: #{decoder_forward.1} parent=1 // pred_region
      %37 = vsyncadd [#allocation8], 0
      %s38 = sshll.u32 %s3, 4
      %s39 = int_to_ptr.hbm [resolvable:$true] %s38
      %s40 = sshll.u32 [#allocation7], 4
      %s41 = int_to_ptr.vmem [resolvable:$true] %s40
      %46 = dma.hbm_to_vmem [thread:$0]  %s39, 256, %s41, [#allocation8], 64, 64, 4
    $region17: #{decoder_forward.1} parent=1 // pred_fallthru
      _
    // Predicated region
    $region18: #{decoder_forward.1} parent=1 // pred_check
      _
    $region19: #{decoder_forward.1} parent=1 // pred_check_branch
      %48 = sbr.rel (0) target = $region21
    $region20: #{decoder_forward.1} parent=1 // pred_region
      _
    $region21: #{decoder_forward.1} parent=1 // pred_fallthru
      _
    // Predicated region
    $region22: #{decoder_forward.1} parent=1 // pred_check
      _
    $region23: #{decoder_forward.1} parent=1 // pred_check_branch
      %50 = sbr.rel (0) target = $region25
    $region24: #{decoder_forward.1} parent=1 // pred_region
      %52 = vsyncadd [#allocation8], 0
      %s53 = sshll.u32 %s5, 4
      %s54 = int_to_ptr.hbm [resolvable:$true] %s53
      %s55 = sshll.u32 [#allocation9], 4
      %s56 = int_to_ptr.vmem [resolvable:$true] %s55
      %61 = dma.hbm_to_vmem [thread:$0]  %s54, 512, %s56, [#allocation8], 64, 64, 4
    $region25: #{decoder_forward.1} parent=1 // pred_fallthru
      _
    // Predicated region
    $region26: #{decoder_forward.1} parent=1 // pred_check
      _
    $region27: #{decoder_forward.1} parent=1 // pred_check_branch
      %63 = sbr.rel (0) target = $region29
    $region28: #{decoder_forward.1} parent=1 // pred_region
      _
    $region29: #{decoder_forward.1} parent=1 // pred_fallthru
      _
    // Predicated region
    $region30: #{decoder_forward.1} parent=1 // pred_check
      _
    $region31: #{decoder_forward.1} parent=1 // pred_check_branch
      %65 = sbr.rel (0) target = $region33
    $region32: #{decoder_forward.1} parent=1 // pred_region
      %67 = vsyncadd [#allocation11], 0
      %s68 = sshll.u32 %s7, 4
      %s69 = int_to_ptr.hbm [resolvable:$true] %s68
      %s70 = sshll.u32 [#allocation10], 4
      %s71 = int_to_ptr.vmem [resolvable:$true] %s70
      %76 = dma.hbm_to_vmem [thread:$0]  %s69, 512, %s71, [#allocation11], 64, 64, 4
    $region33: #{decoder_forward.1} parent=1 // pred_fallthru
      _
    // Predicated region
    $region34: #{decoder_forward.1} parent=1 // pred_check
      _
    $region35: #{decoder_forward.1} parent=1 // pred_check_branch
      %78 = sbr.rel (0) target = $region37
    $region36: #{decoder_forward.1} parent=1 // pred_region
      _
    $region37: #{decoder_forward.1} parent=1 // pred_fallthru
      _
    // Predicated region
    $region38: #{decoder_forward.1} parent=1 // pred_check
      _
    $region39: #{decoder_forward.1} parent=1 // pred_check_branch
      %80 = sbr.rel (0) target = $region41
    $region40: #{decoder_forward.1} parent=1 // pred_region
      %82 = dma.done [#allocation6], 128
    $region41: #{decoder_forward.1} parent=1 // pred_fallthru
      _
    // Predicated region
    $region42: #{decoder_forward.1} parent=1 // pred_check
      _
    $region43: #{decoder_forward.1} parent=1 // pred_check_branch
      %84 = sbr.rel (0) target = $region45
    $region44: #{decoder_forward.1} parent=1 // pred_region
      %86 = dma.done [#allocation8], 256
    $region45: #{decoder_forward.1} parent=1 // pred_fallthru
      _
    // Predicated region
    $region46: #{decoder_forward.1} parent=1 // pred_check
      _
    $region47: #{decoder_forward.1} parent=1 // pred_check_branch
      %88 = sbr.rel (0) target = $region49
    $region48: #{decoder_forward.1} parent=1 // pred_region
      %90 = dma.done [#allocation8], 512
    $region49: #{decoder_forward.1} parent=1 // pred_fallthru
      _
    // Predicated region
    $region50: #{decoder_forward.1} parent=1 // pred_check
      _
    $region51: #{decoder_forward.1} parent=1 // pred_check_branch
      %92 = sbr.rel (0) target = $region53
    $region52: #{decoder_forward.1} parent=1 // pred_region
      %94 = dma.done [#allocation11], 512
    $region53: #{decoder_forward.1} parent=1 // pred_fallthru
      _
    %v96 = vld [vmem:[%s2] sm:$0xff]
    %v97 = vld [vmem:[%s0] sm:$0xff]
    %v98 = vpack.c.bf16 %v97, %v97
    %vm99 = vcmask 125952
    %100 = vst.msk [vmem:[#allocation2] sm:$0xf] %vm99, %v98
    %v101 = vld [vmem:[#allocation5] sm:$0xff]
    %v102 = vpack.c.bf16 %v101, %v101
    %104 = vrot.lane.b32.xlu0 %v102, 16
    %v105 = vpop.permute.xlu0 %104
    %vm107 = vcmask 257152
    %108 = vst.msk [vmem:[#allocation2] sm:$0xf] %vm107, %v105
    %v109 = vld [vmem:[#allocation2] sm:$0xf]
    %v110 = vld [vmem:[#allocation7] sm:$0xf]
    %v111 = vld [vmem:[#allocation7 + $0x4] sm:$0xf]
    %v112 = vld [vmem:[#allocation7 + $0x8] sm:$0xf]
    %v113 = vld [vmem:[#allocation7 + $0xc] sm:$0xf]
    %v114 = vld [vmem:[%s4] sm:$0x1]
    %v116 = vperm.slane %v114, 0
    %v122 = vunpack.c.l.b16 %v110
    %v123 = vunpack.c.l.b16 %v111
    %v124 = vunpack.c.l.b16 %v112
    %v125 = vunpack.c.l.b16 %v113
    %v126 = vpack.c.b16 %v123, %v122
    %v127 = vpack.c.b16 %v125, %v124
    %vm130 = vcmask 261120
    %v132 = vsel %vm130, %v109, 0
    %134 = vmatpush.bf16.msra.mxu0 0
    %135 = vmatpush.bf16.msra.mxu0 0
    %136 = vmatpush.bf16.msra.mxu0 0
    %137 = vmatpush.bf16.msra.mxu0 0
    %138 = vmatpush.bf16.msra.mxu0 0
    %139 = vmatpush.bf16.msra.mxu0 0
    %140 = vmatpush.bf16.msra.mxu0 %v127
    %141 = vmatpush.bf16.msra.mxu0 %v126
    %142 = vmatmul.bf16.gmra.mxu0 %v132
    %v143 = vpop.f32.mrf.mxu0
    %v144 = vadd.f32 %v116, %v143
    %v145 = vpop.f32.mrf.mxu0
    %146 = vdwg.mxu0
    %v147 = vtanh.pop %v144
    %v148 = vpack.c.bf16 %v147, %v147
    %vm149 = vcmask 257024
    %150 = vst.msk [vmem:[#allocation3] sm:$0xf] %vm149, %v148
    %v151 = vpack.c.bf16 %v96, %v96
    %153 = vrot.lane.b32.xlu0 %v151, 32
    %v154 = vpop.permute.xlu0 %153
    %vm156 = vcmask 519424
    %157 = vst.msk [vmem:[#allocation3] sm:$0xf] %vm156, %v154
    %v158 = vld [vmem:[#allocation3] sm:$0xf]
    %v159 = vld [vmem:[#allocation9] sm:$0xf]
    %v160 = vld [vmem:[#allocation9 + $0x4] sm:$0xf]
    %v161 = vld [vmem:[#allocation9 + $0x8] sm:$0xf]
    %v162 = vld [vmem:[#allocation9 + $0xc] sm:$0xf]
    %v163 = vld [vmem:[#allocation9 + $0x10] sm:$0xf]
    %v164 = vld [vmem:[#allocation9 + $0x14] sm:$0xf]
    %v165 = vld [vmem:[#allocation9 + $0x18] sm:$0xf]
    %v166 = vld [vmem:[#allocation9 + $0x1c] sm:$0xf]
    %v167 = vld [vmem:[%s6] sm:$0x1]
    %v169 = vperm.slane %v167, 0
    %v179 = vunpack.c.l.b16 %v159
    %v180 = vunpack.c.l.b16 %v160
    %v181 = vunpack.c.l.b16 %v161
    %v182 = vunpack.c.l.b16 %v162
    %v183 = vunpack.c.l.b16 %v163
    %v184 = vunpack.c.l.b16 %v164
    %v185 = vunpack.c.l.b16 %v165
    %v186 = vunpack.c.l.b16 %v166
    %v187 = vpack.c.b16 %v180, %v179
    %v188 = vpack.c.b16 %v182, %v181
    %v189 = vpack.c.b16 %v184, %v183
    %v190 = vpack.c.b16 %v186, %v185
    %vm195 = vcmask 523264
    %v197 = vsel %vm195, %v158, 0
    %199 = vmatpush.bf16.msra.mxu0 0
    %200 = vmatpush.bf16.msra.mxu0 0
    %201 = vmatpush.bf16.msra.mxu0 0
    %202 = vmatpush.bf16.msra.mxu0 0
    %203 = vmatpush.bf16.msra.mxu0 %v190
    %204 = vmatpush.bf16.msra.mxu0 %v189
    %205 = vmatpush.bf16.msra.mxu0 %v188
    %206 = vmatpush.bf16.msra.mxu0 %v187
    %207 = vmatmul.bf16.gmra.mxu0 %v197
    %v208 = vpop.f32.mrf.mxu0
    %v209 = vadd.f32 %v169, %v208
    %v210 = vpop.f32.mrf.mxu0
    %211 = vdwg.mxu0
    %v212 = vxor.u32 %v209, 2147483648
    %v213 = vmul.f32 %v212, 1.442695
    %v214 = vpow.pop %v213
    %v215 = vadd.f32 %v214, 1.0
    %v216 = vrcp.pop %v215
    %v217 = vmul.f32 %v215, %v216
    %v218 = vsub.f32 1.0, %v217
    %v219 = vmul.f32 %v216, %v218
    %v220 = vadd.f32 %v216, %v219
    %vm221 = vweird.f32 %v215
    %vm222 = vweird.f32 %v216
    %vm223 = vmor %vm221, %vm222
    %v224 = vsel %vm223, %v216, %v220
    %v225 = vand.u32 2147483647, %v215
    %vm226 = vcmp.eq.f32.partialorder %v225, 8.507059e+37
    %v227 = vand.u32 %v215, 2147483648
    %v228 = vor.u32 1.1754944e-38, %v227
    %v229 = vsel %vm226, %v228, %v224
    %v230 = vmul.f32 1.0, %v229
    %232 = vrot.lane.b32.xlu0 %v209, 32
    %v233 = vpop.permute.xlu0 %232
    %v235 = vmul.f32 %v230, %v233
    %237 = vrot.lane.b32.xlu0 %v235, 64
    %v238 = vpop.permute.xlu0 %237
    %v240 = vadd.f32 %v209, %v238
    %v241 = vtanh.pop %v240
    %v242 = vsub.f32 1.0, %v230
    %244 = vrot.lane.b32.xlu0 %v241, 96
    %v245 = vpop.permute.xlu0 %244
    %v247 = vmul.f32 %v242, %v245
    %249 = vrot.lane.b32.xlu0 %v96, 32
    %v250 = vpop.permute.xlu0 %249
    %v252 = vmul.f32 %v230, %v250
    %v253 = vadd.f32 %v247, %v252
    %v254 = vmax.f32 %v253, 0.0
    %v255 = vpack.c.bf16 %v254, %v254
    %257 = vrot.lane.b32.xlu0 %v255, 96
    %v258 = vpop.permute.xlu0 %257
    %260 = vst.msk [vmem:[#allocation4] sm:$0xf] %vm149, %v258
    %v261 = vmax.f32 %v147, 0.0
    %v262 = vpack.c.bf16 %v261, %v261
    %264 = vrot.lane.b32.xlu0 %v262, 32
    %v265 = vpop.permute.xlu0 %264
    %267 = vst.msk [vmem:[#allocation4] sm:$0xf] %vm156, %v265
    %v268 = vld [vmem:[#allocation4] sm:$0xf]
    %v269 = vld [vmem:[#allocation10] sm:$0xf]
    %v270 = vld [vmem:[#allocation10 + $0x4] sm:$0xf]
    %v271 = vld [vmem:[#allocation10 + $0x8] sm:$0xf]
    %v272 = vld [vmem:[#allocation10 + $0xc] sm:$0xf]
    %v273 = vld [vmem:[#allocation10 + $0x10] sm:$0xf]
    %v274 = vld [vmem:[#allocation10 + $0x14] sm:$0xf]
    %v275 = vld [vmem:[#allocation10 + $0x18] sm:$0xf]
    %v276 = vld [vmem:[#allocation10 + $0x1c] sm:$0xf]
    %v277 = vld [vmem:[%s8] sm:$0x1]
    %v279 = vperm.slane %v277, 0
    %v289 = vunpack.c.l.b16 %v269
    %v290 = vunpack.c.l.b16 %v270
    %v291 = vunpack.c.l.b16 %v271
    %v292 = vunpack.c.l.b16 %v272
    %v293 = vunpack.c.l.b16 %v273
    %v294 = vunpack.c.l.b16 %v274
    %v295 = vunpack.c.l.b16 %v275
    %v296 = vunpack.c.l.b16 %v276
    %v297 = vpack.c.b16 %v290, %v289
    %v298 = vpack.c.b16 %v292, %v291
    %v299 = vpack.c.b16 %v294, %v293
    %v300 = vpack.c.b16 %v296, %v295
    %v306 = vsel %vm195, %v268, 0
    %308 = vmatpush.bf16.msra.mxu0 0
    %309 = vmatpush.bf16.msra.mxu0 0
    %310 = vmatpush.bf16.msra.mxu0 0
    %311 = vmatpush.bf16.msra.mxu0 0
    %312 = vmatpush.bf16.msra.mxu0 %v300
    %313 = vmatpush.bf16.msra.mxu0 %v299
    %314 = vmatpush.bf16.msra.mxu0 %v298
    %315 = vmatpush.bf16.msra.mxu0 %v297
    %316 = vmatmul.bf16.gmra.mxu0 %v306
    %v317 = vpop.f32.mrf.mxu0
    %v318 = vadd.f32 %v279, %v317
    %v319 = vpop.f32.mrf.mxu0
    %320 = vdwg.mxu0
    %321 = vst [vmem:[%s9] sm:$0xff] %v318
    %323 = vrot.lane.b32.xlu0 %v253, 96
    %v324 = vpop.permute.xlu0 %323
    %326 = vst.msk [vmem:[%s10] sm:$0xff] %vm130, %v324
    // Predicated region
    $region54: #{decoder_forward.1} parent=1 // pred_check
      _
    $region55: #{decoder_forward.1} parent=1 // pred_check_branch
      %328 = sbr.rel (0) target = $region57
    $region56: #{decoder_forward.1} parent=1 // pred_region
      _
    $region57: #{decoder_forward.1} parent=1 // pred_fallthru
      _
    // Predicated region
    $region58: #{decoder_forward.1} parent=1 // pred_check
      _
    $region59: #{decoder_forward.1} parent=1 // pred_check_branch
      %330 = sbr.rel (0) target = $region61
    $region60: #{decoder_forward.1} parent=1 // pred_region
      _
    $region61: #{decoder_forward.1} parent=1 // pred_fallthru
      _
    // Predicated region
    $region62: #{decoder_forward.1} parent=1 // pred_check
      _
    $region63: #{decoder_forward.1} parent=1 // pred_check_branch
      %332 = sbr.rel (0) target = $region65
    $region64: #{decoder_forward.1} parent=1 // pred_region
      _
    $region65: #{decoder_forward.1} parent=1 // pred_fallthru
      _
    // Predicated region
    $region66: #{decoder_forward.1} parent=1 // pred_check
      _
    $region67: #{decoder_forward.1} parent=1 // pred_check_branch
      %334 = sbr.rel (0) target = $region69
    $region68: #{decoder_forward.1} parent=1 // pred_region
      _
    $region69: #{decoder_forward.1} parent=1 // pred_fallthru
      _
    %335 = vsyncpa [#allocation6], 1
    %336 = vsyncpa [#allocation8], 1
    %337 = vsyncpa [#allocation11], 1

</llo_original>
